<compile_context>
chip_gen: v5e
topology: v5e:2x2
jax: 0.10.0
libtpu: 0.0.40
codegen_flags: <defaults>
</compile_context>

<pallas_src>
import jax
import jax.numpy as jnp
from jax import lax
from jax.experimental import pallas as pl
from jax.experimental.pallas import tpu as pltpu


def _argmax_c_kernel(x_ref, o_ref):
    # x_ref: (TB, C, TL)  -- batch tile, all channels, lane-dense spatial tile
    # o_ref: (TB, 1, TL)  -- argmax index over the channel axis (int32)
    x = x_ref[...]
    C = x.shape[1]
    # jnp.max propagates NaN, so a column containing NaN gets max_val = NaN and
    # the isnan term makes the first NaN the winner -> matches torch/jnp argmax.
    max_val = jnp.max(x, axis=1, keepdims=True)              # (TB, 1, TL)
    winner = (x == max_val) | jnp.isnan(x)                   # (TB, C, TL)
    # Sublane iota broadcast against the block: avoids materializing a full
    # (TB, C, TL) iota in vregs.
    ch_idx = lax.broadcasted_iota(jnp.int32, (1, C, 1), 1)   # (1, C, 1)
    first_idx = jnp.min(jnp.where(winner, ch_idx, jnp.int32(C)),
                        axis=1, keepdims=True)               # (TB, 1, TL)
    o_ref[...] = first_idx.astype(jnp.int32)


def _choose_tiles(B, C, L, itemsize, target_block_bytes):
    """Pick (TB, TL) so each (VMEM-padded) input block is ~target_block_bytes."""
    c_pad = max(8, -(-C // 8) * 8)          # channel dim pads to 8 sublanes in VMEM
    per_lane_bytes = c_pad * itemsize
    per_batch_bytes = per_lane_bytes * L
    if per_batch_bytes <= target_block_bytes:
        # Small spatial extent: take full L and group batch elements so each
        # DMA is large (avoids tiny KiB-sized blocks + per-grid-step overhead).
        TL = L
        TB = max(1, min(B, target_block_bytes // max(per_batch_bytes, 1)))
    else:
        # Large spatial extent: tile the lane axis in multiples of 128 so the
        # double-buffered input (+ output) stays well under scoped-VMEM budgets
        # on every generation (v5e 16 MiB default, v7x 64 MiB physical).
        TB = 1
        if L <= 128:
            TL = L
        else:
            tl = (target_block_bytes // per_lane_bytes) // 128 * 128
            TL = min(L, max(128, tl))
    return TB, TL


def argmax_interpreter(x, *, target_block_bytes=2 * 1024 * 1024):
    """Equivalent of ArgmaxInterpreter().forward(x) for NCHW input x.

    Returns int32 indices; ties and NaN columns resolve to the first (lowest)
    channel index, matching torch.argmax semantics.
    """
    B, C, H, W = x.shape
    L = H * W
    xr = x.reshape(B, C, L)
    TB, TL = _choose_tiles(B, C, L, xr.dtype.itemsize, target_block_bytes)
    grid = (pl.cdiv(B, TB), pl.cdiv(L, TL))
    out = pl.pallas_call(
        _argmax_c_kernel,
        out_shape=jax.ShapeDtypeStruct((B, 1, L), jnp.int32),
        grid=grid,
        in_specs=[pl.BlockSpec((TB, C, TL), lambda b, l: (b, 0, l))],
        out_specs=pl.BlockSpec((TB, 1, TL), lambda b, l: (b, 0, l)),
        compiler_params=pltpu.CompilerParams(
            # Both axes are independent -> shardable across the two v7x
            # TensorCores; harmless elsewhere.
            dimension_semantics=("parallel", "parallel"),
        ),
    )(xr)
    # TODO(synk): if callers tolerate narrower indices (C <= 127), emitting
    # int8/int16 here would shave the output share of HBM traffic further.
    return out.reshape(B, H, W)


if __name__ == "__main__":
    key = jax.random.PRNGKey(0)
    # Small NCHW input matching the module: batch=2, channels=4, spatial 16x16.
    x = jax.random.normal(key, (2, 4, 16, 16), dtype=jnp.float32)
    y = jax.block_until_ready(argmax_interpreter(x))
    y_ref = jnp.argmax(x, axis=1).astype(jnp.int32)
    assert y.shape == (2, 16, 16), y.shape
    assert y.dtype == jnp.int32, y.dtype
    assert bool(jnp.all(y == y_ref)), "Pallas argmax mismatch vs jnp.argmax (small case)"

    # Exercise the tiled multi-step grid path (tiny VMEM budget) plus ties/NaN.
    x2 = jax.random.normal(jax.random.PRNGKey(1), (2, 4, 32, 32), dtype=jnp.float32)
    x2 = x2.at[0, :, 0, 0].set(1.0)         # exact tie -> lowest channel index
    x2 = x2.at[1, 2, 3, 5].set(jnp.nan)     # NaN column -> first NaN index
    y2 = jax.block_until_ready(argmax_interpreter(x2, target_block_bytes=8 * 1024))
    y2_ref = jnp.argmax(x2, axis=1).astype(jnp.int32)
    assert bool(jnp.all(y2 == y2_ref)), "Pallas argmax mismatch (tiled / tie / NaN case)"

    print("KERNEL_OK")
</pallas_src>

<mosaic_0001>
module attributes {stable_mosaic.version = 11 : i64} {
  func.func @_argmax_c_kernel(%arg0: i32, %arg1: i32, %arg2: memref<2x4x256xf32, #tpu.memory_space<vmem>>, %arg3: memref<2x1x256xi32, #tpu.memory_space<vmem>>) attributes {dimension_semantics = [#tpu.dimension_semantics<parallel>, #tpu.dimension_semantics<parallel>], iteration_bounds = array<i64: 1, 1>, scalar_prefetch = 0 : i64, scratch_operands = 0 : i64, tpu.core_type = #tpu.core_type<tc>, window_params = [{transform_indices = @transform_0, window_bounds = array<i64: 2, 4, 256>}, {transform_indices = @transform_1, window_bounds = array<i64: 2, 1, 256>}]} {
    %c0 = arith.constant 0 : index
    %c0_0 = arith.constant 0 : index
    %c0_1 = arith.constant 0 : index
    %0 = vector.load %arg2[%c0, %c0_0, %c0_1] : memref<2x4x256xf32, #tpu.memory_space<vmem>>, vector<2x4x256xf32>
    %cst = arith.constant dense<0xFF800000> : vector<2x256xf32>
    %1 = vector.multi_reduction <maximumf>, %0, %cst [1] : vector<2x4x256xf32> to vector<2x256xf32>
    %2 = vector.shape_cast %1 : vector<2x256xf32> to vector<2x1x256xf32>
    %3 = vector.broadcast %2 : vector<2x1x256xf32> to vector<2x4x256xf32>
    %4 = arith.cmpf oeq, %0, %3 : vector<2x4x256xf32>
    %5 = arith.cmpf one, %0, %0 : vector<2x4x256xf32>
    %6 = arith.ori %4, %5 : vector<2x4x256xi1>
    %7 = tpu.iota {dimensions = array<i32: 1>} : vector<1x4x1xi32>
    %c4_i32 = arith.constant 4 : i32
    %8 = vector.shape_cast %7 : vector<1x4x1xi32> to vector<1x4x1xi32>
    %9 = vector.broadcast %8 : vector<1x4x1xi32> to vector<2x4x256xi32>
    %10 = vector.broadcast %c4_i32 : i32 to vector<2x4x256xi32>
    %11 = arith.select %6, %9, %10 : vector<2x4x256xi1>, vector<2x4x256xi32>
    %cst_2 = arith.constant dense<2147483647> : vector<2x256xi32>
    %12 = vector.multi_reduction <minsi>, %11, %cst_2 [1] : vector<2x4x256xi32> to vector<2x256xi32>
    %13 = vector.shape_cast %12 : vector<2x256xi32> to vector<2x1x256xi32>
    %c0_3 = arith.constant 0 : index
    %c0_4 = arith.constant 0 : index
    %c0_5 = arith.constant 0 : index
    %14 = vector.load %arg3[%c0_3, %c0_4, %c0_5] : memref<2x1x256xi32, #tpu.memory_space<vmem>>, vector<2x1x256xi32>
    tpu.vector_store %arg3[%c0_3, %c0_4, %c0_5], %13 {strides = array<i32>} : memref<2x1x256xi32, #tpu.memory_space<vmem>>, vector<2x1x256xi32>,
    return
  }
  func.func @transform_0(%arg0: i32, %arg1: i32) -> (i32, i32, i32) {
    %c0_i32 = arith.constant 0 : i32
    %c0_i32_0 = arith.constant 0 : i32
    return %arg0, %c0_i32, %arg1 : i32, i32, i32
  }
  func.func @transform_1(%arg0: i32, %arg1: i32) -> (i32, i32, i32) {
    %c0_i32 = arith.constant 0 : i32
    %c0_i32_0 = arith.constant 0 : i32
    return %arg0, %c0_i32, %arg1 : i32, i32, i32
  }
}

</mosaic_0001>

<llo_original>
// kernel: tpu_custom_call.1
$region0: #{tpu_custom_call.1}
  #allocation0 [shape = 'u32[]', space=smem, size = 0x4, offset = 0x4, fixed_abs, tag = 'smem constant byte address 0x4 - core index']
  #allocation1 [shape = 'u32[72,128]{1,0:T(1,128)}', space=vmem, size = 0x9000, scoped, tag = 'internal scratch']
  %s0 = inlined_call_operand.hbm [shape: f32[2,4,256], index: 0, kind: input, shape index: {}]
  %s1 = inlined_call_operand.hbm [shape: s32[2,1,256], index: 1, kind: output, shape index: {}]
  %s2 = sld [smem:[#allocation0]]
  $region18: #{tpu_custom_call.1} parent=0
    _
  %s4 = ssub.s32 1, %s2
  %s5 = scalar_select 0, %s4, %s2
  $region1: #{tpu_custom_call.1} parent=0
    #allocation2 [shape = 'u8[8192]{0}', space=vmem, size = 0x2000, scoped, tag = 'input window, operand 0, single buffered']
    #allocation3 [shape = 's32[1]{0}', space=sflag, size = 0x4, scoped, tag = 'scoped memory for tpu_custom_call.1']
    #allocation4 [shape = 's32[1]{0}', space=sflag, size = 0x4, scoped, tag = 'scoped memory for tpu_custom_call.1']
    #allocation5 [shape = 'u8[2048]{0}', space=vmem, size = 0x800, scoped, tag = 'output window, operand 0, single buffered']
    %6 = vsyncpa [#allocation3], 0
    %7 = vsyncpa [#allocation4], 0
    // Predicated region
    $region2: #{tpu_custom_call.1} parent=1 // pred_check
      _
    $region3: #{tpu_custom_call.1} parent=1 // pred_check_branch
      %9 = sbr.rel (0) target = $region5
    $region4: #{tpu_custom_call.1} parent=1 // pred_region
      %11 = vsyncadd [#allocation3], 0
      %s12 = sshll.u32 %s0, 4
      %s13 = int_to_ptr.hbm [resolvable:$true] %s12
      %s14 = sshll.u32 [#allocation2], 4
      %s15 = int_to_ptr.vmem [resolvable:$true] %s14
      %20 = dma.hbm_to_vmem [thread:$0]  %s13, 256, %s15, [#allocation3], 128, 128, 8
    $region5: #{tpu_custom_call.1} parent=1 // pred_fallthru
      _
    // Predicated region
    $region6: #{tpu_custom_call.1} parent=1 // pred_check
      _
    $region7: #{tpu_custom_call.1} parent=1 // pred_check_branch
      %22 = sbr.rel (0) target = $region9
    $region8: #{tpu_custom_call.1} parent=1 // pred_region
      %24 = dma.done [#allocation3], 256
    $region9: #{tpu_custom_call.1} parent=1 // pred_fallthru
      _
    %v25 = vld [vmem:[#allocation2] sm:$0xff]
    %v26 = vld [vmem:[#allocation2 + $0x8] sm:$0xff]
    %29 = vst [vmem:[#allocation1] ss:$2 sm:$0xff] %v25
    %v30 = vld.sshfl [vmem:[#allocation1] sm:$0xff pattern:$0x75316420]
    %v31 = vld.sshfl [vmem:[#allocation1 + $0x8] sm:$0xff pattern:$0x75316420]
    %s32 = scalar_lea.vmem [#allocation1], 16
    %33 = vst [vmem:[%s32] ss:$2 sm:$0xff] %v26
    %v34 = vld.sshfl [vmem:[#allocation1 + $0x10] sm:$0xff pattern:$0x75316420]
    %v35 = vld.sshfl [vmem:[#allocation1 + $0x18] sm:$0xff pattern:$0x75316420]
    %vm40 = vcmask 1043456
    %v41 = vsel %vm40, %v30, -inf
    %v42 = vrot.slane %v41, 4
    %v43 = vmax.f32 %v41, %v42
    %v44 = vrot.slane %v43, 2
    %v45 = vmax.f32 %v43, %v44
    %v46 = vrot.slane %v45, 1
    %v47 = vmax.f32 %v45, %v46
    %v48 = vsel %vm40, %v31, -inf
    %v49 = vrot.slane %v48, 4
    %v50 = vmax.f32 %v48, %v49
    %v51 = vrot.slane %v50, 2
    %v52 = vmax.f32 %v50, %v51
    %v53 = vrot.slane %v52, 1
    %v54 = vmax.f32 %v52, %v53
    %v55 = vsel %vm40, %v34, -inf
    %v56 = vrot.slane %v55, 4
    %v57 = vmax.f32 %v55, %v56
    %v58 = vrot.slane %v57, 2
    %v59 = vmax.f32 %v57, %v58
    %v60 = vrot.slane %v59, 1
    %v61 = vmax.f32 %v59, %v60
    %v62 = vsel %vm40, %v35, -inf
    %v63 = vrot.slane %v62, 4
    %v64 = vmax.f32 %v62, %v63
    %v65 = vrot.slane %v64, 2
    %v66 = vmax.f32 %v64, %v65
    %v67 = vrot.slane %v66, 1
    %v68 = vmax.f32 %v66, %v67
    %v73 = vrot.slane %v54, 4
    %v74 = vrot.slane %v68, 4
    %v75 = vsel %vm40, %v47, %v73
    %v76 = vsel %vm40, %v61, %v74
    %vm79 = vcmp.eq.f32.partialorder %v25, %v75
    %vm80 = vcmp.eq.f32.partialorder %v26, %v76
    %vm81 = vcmp.ne.f32.partialorder %v25, %v25
    %vm82 = vcmp.ne.f32.partialorder %v26, %v26
    %vm83 = vmor %vm79, %vm81
    %vm84 = vmor %vm80, %vm82
    %v85 = vlaneseq
    %v86 = vshrl.u32 %v85, 7
    %v88 = vunpack.c.l.s4 839922192
    %v89 = vunpack.c.0.s8 %v88
    %v90 = vperm.slane %v86, %v89
    %v91 = vsel %vm83, %v90, 4
    %v92 = vsel %vm84, %v90, 4
    %93 = vst [vmem:[#allocation1] ss:$2 sm:$0xff] %v91
    %v94 = vld.sshfl [vmem:[#allocation1] sm:$0xff pattern:$0x75316420]
    %v95 = vld.sshfl [vmem:[#allocation1 + $0x8] sm:$0xff pattern:$0x75316420]
    %s96 = scalar_lea.vmem [#allocation1], 16
    %97 = vst [vmem:[%s96] ss:$2 sm:$0xff] %v92
    %v98 = vld.sshfl [vmem:[#allocation1 + $0x10] sm:$0xff pattern:$0x75316420]
    %v99 = vld.sshfl [vmem:[#allocation1 + $0x18] sm:$0xff pattern:$0x75316420]
    %v100 = vsel %vm40, %v94, 2147483647
    %v101 = vrot.slane %v100, 4
    %vm102 = vcmp.lt.s32.totalorder %v100, %v101
    %v103 = vsel %vm102, %v100, %v101
    %v104 = vrot.slane %v103, 2
    %vm105 = vcmp.lt.s32.totalorder %v103, %v104
    %v106 = vsel %vm105, %v103, %v104
    %v107 = vrot.slane %v106, 1
    %vm108 = vcmp.lt.s32.totalorder %v106, %v107
    %v109 = vsel %vm108, %v106, %v107
    %v110 = vsel %vm40, %v95, 2147483647
    %v111 = vrot.slane %v110, 4
    %vm112 = vcmp.lt.s32.totalorder %v110, %v111
    %v113 = vsel %vm112, %v110, %v111
    %v114 = vrot.slane %v113, 2
    %vm115 = vcmp.lt.s32.totalorder %v113, %v114
    %v116 = vsel %vm115, %v113, %v114
    %v117 = vrot.slane %v116, 1
    %vm118 = vcmp.lt.s32.totalorder %v116, %v117
    %v119 = vsel %vm118, %v116, %v117
    %v120 = vsel %vm40, %v98, 2147483647
    %v121 = vrot.slane %v120, 4
    %vm122 = vcmp.lt.s32.totalorder %v120, %v121
    %v123 = vsel %vm122, %v120, %v121
    %v124 = vrot.slane %v123, 2
    %vm125 = vcmp.lt.s32.totalorder %v123, %v124
    %v126 = vsel %vm125, %v123, %v124
    %v127 = vrot.slane %v126, 1
    %vm128 = vcmp.lt.s32.totalorder %v126, %v127
    %v129 = vsel %vm128, %v126, %v127
    %v130 = vsel %vm40, %v99, 2147483647
    %v131 = vrot.slane %v130, 4
    %vm132 = vcmp.lt.s32.totalorder %v130, %v131
    %v133 = vsel %vm132, %v130, %v131
    %v134 = vrot.slane %v133, 2
    %vm135 = vcmp.lt.s32.totalorder %v133, %v134
    %v136 = vsel %vm135, %v133, %v134
    %v137 = vrot.slane %v136, 1
    %vm138 = vcmp.lt.s32.totalorder %v136, %v137
    %v139 = vsel %vm138, %v136, %v137
    %v140 = vrot.slane %v119, 7
    %v141 = vrot.slane %v139, 7
    %vm142 = vcmask 1040384
    %v143 = vsel %vm142, %v109, %v140
    %v144 = vsel %vm142, %v129, %v141
    %v145 = vlaneseq
    %vm146 = vcmp.ge.s32.totalorder %v145, 0
    %vm147 = vcmp.lt.s32.totalorder %v145, 256
    %vm148 = vmand %vm146, %vm147
    %149 = vst.msk [vmem:[#allocation5] sm:$0x3] %vm148, %v143
    %150 = vst.msk [vmem:[#allocation5 + $0x2] sm:$0x3] %vm148, %v144
    // Predicated region
    $region10: #{tpu_custom_call.1} parent=1 // pred_check
      _
    $region11: #{tpu_custom_call.1} parent=1 // pred_check_branch
      %152 = sbr.rel (0) target = $region13
    $region12: #{tpu_custom_call.1} parent=1 // pred_region
      %154 = vsyncadd [#allocation4], 0
      %s155 = sshll.u32 [#allocation5], 4
      %s156 = int_to_ptr.vmem [resolvable:$true] %s155
      %s157 = sshll.u32 %s1, 4
      %s158 = int_to_ptr.hbm [resolvable:$true] %s157
      %163 = dma.vmem_to_hbm [thread:$0]  %s156, 64, %s158, [#allocation4], 32, 32, 2
    $region13: #{tpu_custom_call.1} parent=1 // pred_fallthru
      _
    // Predicated region
    $region14: #{tpu_custom_call.1} parent=1 // pred_check
      _
    $region15: #{tpu_custom_call.1} parent=1 // pred_check_branch
      %165 = sbr.rel (0) target = $region17
    $region16: #{tpu_custom_call.1} parent=1 // pred_region
      %167 = dma.done [#allocation4], 64
    $region17: #{tpu_custom_call.1} parent=1 // pred_fallthru
      _
    %168 = vsyncpa [#allocation3], 1
    %169 = vsyncpa [#allocation4], 1

</llo_original>
